<compile_context>
chip_gen: v7x
topology: tpu7x:2x2x1
jax: 0.10.0
libtpu: 0.0.40
codegen_flags: <defaults>
</compile_context>

<pallas_src>
import functools

import jax
import jax.numpy as jnp
from jax import lax
from jax.experimental import pallas as pl
from jax.experimental.pallas import tpu as pltpu

EPS = 1e-5  # torch.nn.LayerNorm default


def _image_proj_kernel(x_ref, w_ref, b_ref, g_ref, beta_ref, o_ref, *,
                       n_tok, cross_dim):
    """One grid step = `n_tok` extra-context tokens.

    x_ref    : (B_pad, Din)        full image embeddings (bf16 or f32)
    w_ref    : (Din, n_tok*C)      column-slice of pre-transposed proj weight
    b_ref    : (1, n_tok*C)        slice of proj bias (f32)
    g_ref    : (1, C)              LayerNorm weight (f32)
    beta_ref : (1, C)              LayerNorm bias (f32)
    o_ref    : (B_pad, n_tok*C)    output tile for these tokens
    """
    # Linear on the MXU; accumulate in f32 regardless of input/weight dtype.
    y = jnp.dot(x_ref[...], w_ref[...], preferred_element_type=jnp.float32)
    y = y + b_ref[...].astype(jnp.float32)

    gamma = g_ref[...].astype(jnp.float32)
    beta = beta_ref[...].astype(jnp.float32)

    # LayerNorm per cross_dim chunk (static, lane-aligned slices; no reshape).
    for t in range(n_tok):
        lo = t * cross_dim
        hi = lo + cross_dim
        chunk = y[:, lo:hi]
        mean = jnp.mean(chunk, axis=-1, keepdims=True)
        centered = chunk - mean
        var = jnp.mean(centered * centered, axis=-1, keepdims=True)
        out = centered * lax.rsqrt(var + EPS) * gamma + beta
        o_ref[:, lo:hi] = out.astype(o_ref.dtype)


def prepare_image_proj_params(proj_w, proj_b, ln_w, ln_b, *, tokens, cross_dim,
                              weight_dtype=jnp.bfloat16):
    """One-time (init-time) parameter reshuffle.

    Transposes the projection weight to (Din, T*C) and casts it to the
    streaming dtype so the per-call hot path never re-transposes / re-casts
    the big weight.
    """
    w_t = jnp.transpose(jnp.asarray(proj_w)).astype(weight_dtype)   # (Din, T*C)
    b2 = jnp.asarray(proj_b, dtype=jnp.float32).reshape(1, tokens * cross_dim)
    g2 = jnp.asarray(ln_w, dtype=jnp.float32).reshape(1, cross_dim)
    beta2 = jnp.asarray(ln_b, dtype=jnp.float32).reshape(1, cross_dim)
    return w_t, b2, g2, beta2


@functools.partial(jax.jit,
                   static_argnames=("tokens", "cross_dim", "tokens_per_step"))
def image_proj_model(image_embeds, w_t, b2, g2, beta2, *,
                     tokens, cross_dim, tokens_per_step=2):
    """image_embeds: (B, Din).  Returns (B, tokens, cross_dim) in input dtype."""
    B, Din = image_embeds.shape
    assert tokens % tokens_per_step == 0, (tokens, tokens_per_step)
    n_steps = tokens // tokens_per_step
    n_cols = tokens_per_step * cross_dim

    out_dtype = image_embeds.dtype

    # Pad batch to a multiple of 8 sublanes so stores are unmasked.
    B_pad = max(8, ((B + 7) // 8) * 8)
    x = image_embeds.astype(w_t.dtype)
    if B_pad != B:
        x = jnp.pad(x, ((0, B_pad - B), (0, 0)))

    itemsize = lambda a: jnp.dtype(a.dtype).itemsize
    out_bytes = B_pad * tokens * cross_dim * jnp.dtype(out_dtype).itemsize
    cost = pl.CostEstimate(
        flops=2 * B_pad * Din * tokens * cross_dim,
        transcendentals=B_pad * tokens,  # one rsqrt per (row, token)
        bytes_accessed=(x.size * itemsize(x) + w_t.size * itemsize(w_t)
                        + b2.size * itemsize(b2) + g2.size * itemsize(g2)
                        + beta2.size * itemsize(beta2) + out_bytes),
    )

    kernel = functools.partial(_image_proj_kernel,
                               n_tok=tokens_per_step, cross_dim=cross_dim)

    out_flat = pl.pallas_call(
        kernel,
        out_shape=jax.ShapeDtypeStruct((B_pad, tokens * cross_dim), out_dtype),
        grid_spec=pltpu.PrefetchScalarGridSpec(
            num_scalar_prefetch=0,
            grid=(n_steps,),
            in_specs=[
                pl.BlockSpec((B_pad, Din), lambda j: (0, 0)),      # x: full, constant
                pl.BlockSpec((Din, n_cols), lambda j: (0, j)),     # W column slab
                pl.BlockSpec((1, n_cols), lambda j: (0, j)),       # bias slab
                pl.BlockSpec((1, cross_dim), lambda j: (0, 0)),    # LN gamma
                pl.BlockSpec((1, cross_dim), lambda j: (0, 0)),    # LN beta
            ],
            out_specs=pl.BlockSpec((B_pad, n_cols), lambda j: (0, j)),
        ),
        compiler_params=pltpu.CompilerParams(
            # Token axis is fully independent -> shard across TCs on v7x.
            dimension_semantics=("parallel",),
            # Headroom for wider N tiles; well under physical VMEM on all gens.
            vmem_limit_bytes=48 * 1024 * 1024,
        ),
        cost_estimate=cost,
    )(x, w_t, b2, g2, beta2)

    # Free contiguous reshape (+ slice off batch padding); no transpose needed.
    return out_flat[:B].reshape(B, tokens, cross_dim)


def image_proj_model_ref(image_embeds, w, b, ln_w, ln_b, *, tokens, cross_dim):
    """Pure-JAX f32 reference mirroring the PyTorch forward."""
    y = image_embeds @ w.T + b                                   # Linear
    y = y.reshape(-1, tokens, cross_dim)                         # reshape
    mean = jnp.mean(y, axis=-1, keepdims=True)
    var = jnp.mean((y - mean) ** 2, axis=-1, keepdims=True)
    y = (y - mean) / jnp.sqrt(var + EPS)
    return y * ln_w + ln_b                                       # LayerNorm affine


if __name__ == "__main__":
    # Small shapes consistent with the module (scaled down from 1024/1024/4).
    B = 2
    clip_embeddings_dim = 64
    cross_attention_dim = 128
    clip_extra_context_tokens = 4

    key = jax.random.PRNGKey(0)
    kx, kw, kb = jax.random.split(key, 3)

    x = jax.random.normal(kx, (B, clip_embeddings_dim), dtype=jnp.float32)

    # proj: Linear(clip_embeddings_dim, tokens * cross_attention_dim)
    #   weight shape (tokens*cross, clip_dim), bias shape (tokens*cross,)
    # (zero-initialized in the original module; see NOTE above.)
    proj_w = jax.random.normal(
        kw, (clip_extra_context_tokens * cross_attention_dim, clip_embeddings_dim),
        dtype=jnp.float32) * 0.02
    proj_b = jax.random.normal(
        kb, (clip_extra_context_tokens * cross_attention_dim,), dtype=jnp.float32) * 0.02

    # norm: LayerNorm(cross_attention_dim) default affine init (ones / zeros).
    ln_w = jnp.ones((cross_attention_dim,), dtype=jnp.float32)
    ln_b = jnp.zeros((cross_attention_dim,), dtype=jnp.float32)

    ref = image_proj_model_ref(
        x, proj_w, proj_b, ln_w, ln_b,
        tokens=clip_extra_context_tokens, cross_dim=cross_attention_dim)

    # --- f32 weight path: exact check against the reference -----------------
    params_f32 = prepare_image_proj_params(
        proj_w, proj_b, ln_w, ln_b,
        tokens=clip_extra_context_tokens, cross_dim=cross_attention_dim,
        weight_dtype=jnp.float32)
    out_f32 = image_proj_model(
        x, *params_f32,
        tokens=clip_extra_context_tokens, cross_dim=cross_attention_dim,
        tokens_per_step=2)
    out_f32 = jax.block_until_ready(out_f32)
    assert out_f32.shape == (B, clip_extra_context_tokens, cross_attention_dim), out_f32.shape
    assert jnp.allclose(out_f32, ref, atol=1e-5, rtol=1e-5), \
        float(jnp.max(jnp.abs(out_f32 - ref)))

    # --- bf16 streaming path (production config): loose tolerance -----------
    params_bf16 = prepare_image_proj_params(
        proj_w, proj_b, ln_w, ln_b,
        tokens=clip_extra_context_tokens, cross_dim=cross_attention_dim,
        weight_dtype=jnp.bfloat16)
    out_bf16 = image_proj_model(
        x, *params_bf16,
        tokens=clip_extra_context_tokens, cross_dim=cross_attention_dim,
        tokens_per_step=2)
    out_bf16 = jax.block_until_ready(out_bf16)
    assert out_bf16.shape == (B, clip_extra_context_tokens, cross_attention_dim)
    assert jnp.allclose(out_bf16, ref, atol=5e-2, rtol=5e-2), \
        float(jnp.max(jnp.abs(out_bf16 - ref)))

    print("KERNEL_OK")
</pallas_src>

<mosaic_0001>
module attributes {stable_mosaic.version = 11 : i64} {
  func.func @_image_proj_kernel(%arg0: i32, %arg1: memref<8x64xf32, #tpu.memory_space<vmem>>, %arg2: memref<64x256xf32, #tpu.memory_space<vmem>>, %arg3: memref<1x256xf32, #tpu.memory_space<vmem>>, %arg4: memref<1x128xf32, #tpu.memory_space<vmem>>, %arg5: memref<1x128xf32, #tpu.memory_space<vmem>>, %arg6: memref<8x256xf32, #tpu.memory_space<vmem>>) attributes {dimension_semantics = [#tpu.dimension_semantics<parallel>], iteration_bounds = array<i64: 2>, scalar_prefetch = 0 : i64, scratch_operands = 0 : i64, tpu.core_type = #tpu.core_type<tc>, window_params = [{pipeline_mode = #tpu.pipeline_mode<synchronous>, transform_indices = @transform_0, window_bounds = array<i64: 8, 64>}, {transform_indices = @transform_1, window_bounds = array<i64: 64, 256>}, {transform_indices = @transform_2, window_bounds = array<i64: 1, 256>}, {pipeline_mode = #tpu.pipeline_mode<synchronous>, transform_indices = @transform_3, window_bounds = array<i64: 1, 128>}, {pipeline_mode = #tpu.pipeline_mode<synchronous>, transform_indices = @transform_4, window_bounds = array<i64: 1, 128>}, {transform_indices = @transform_5, window_bounds = array<i64: 8, 256>}]} {
    %c0 = arith.constant 0 : index
    %c0_0 = arith.constant 0 : index
    %0 = vector.load %arg1[%c0, %c0_0] : memref<8x64xf32, #tpu.memory_space<vmem>>, vector<8x64xf32>
    %c0_1 = arith.constant 0 : index
    %c0_2 = arith.constant 0 : index
    %1 = vector.load %arg2[%c0_1, %c0_2] : memref<64x256xf32, #tpu.memory_space<vmem>>, vector<64x256xf32>
    %cst = arith.constant dense<0.000000e+00> : vector<8x256xf32>
    %2 = tpu.matmul %0, %1, %cst {dimension_numbers = #tpu.dot_dimension_numbers<[1], [0], [0], [1], [0, 0, 1, 1], [], []>} : vector<8x64xf32>, vector<64x256xf32>, vector<8x256xf32> -> vector<8x256xf32>
    %c0_3 = arith.constant 0 : index
    %c0_4 = arith.constant 0 : index
    %3 = vector.load %arg3[%c0_3, %c0_4] : memref<1x256xf32, #tpu.memory_space<vmem>>, vector<1x256xf32>
    %4 = vector.broadcast %3 : vector<1x256xf32> to vector<8x256xf32>
    %5 = arith.addf %2, %4 : vector<8x256xf32>
    %c0_5 = arith.constant 0 : index
    %c0_6 = arith.constant 0 : index
    %6 = vector.load %arg4[%c0_5, %c0_6] : memref<1x128xf32, #tpu.memory_space<vmem>>, vector<1x128xf32>
    %c0_7 = arith.constant 0 : index
    %c0_8 = arith.constant 0 : index
    %7 = vector.load %arg5[%c0_7, %c0_8] : memref<1x128xf32, #tpu.memory_space<vmem>>, vector<1x128xf32>
    %8 = vector.extract_strided_slice %5 {offsets = [0, 0], sizes = [8, 128], strides = [1, 1]} : vector<8x256xf32> to vector<8x128xf32>
    %cst_9 = arith.constant dense<0.000000e+00> : vector<8xf32>
    %9 = vector.multi_reduction <add>, %8, %cst_9 [1] : vector<8x128xf32> to vector<8xf32>
    %10 = vector.shape_cast %9 : vector<8xf32> to vector<8x1xf32>
    %cst_10 = arith.constant 1.280000e+02 : f32
    %11 = vector.broadcast %cst_10 : f32 to vector<8x1xf32>
    %12 = arith.divf %10, %11 : vector<8x1xf32>
    %13 = vector.broadcast %12 : vector<8x1xf32> to vector<8x128xf32>
    %14 = arith.subf %8, %13 : vector<8x128xf32>
    %15 = arith.mulf %14, %14 : vector<8x128xf32>
    %cst_11 = arith.constant dense<0.000000e+00> : vector<8xf32>
    %16 = vector.multi_reduction <add>, %15, %cst_11 [1] : vector<8x128xf32> to vector<8xf32>
    %17 = vector.shape_cast %16 : vector<8xf32> to vector<8x1xf32>
    %cst_12 = arith.constant 1.280000e+02 : f32
    %18 = vector.broadcast %cst_12 : f32 to vector<8x1xf32>
    %19 = arith.divf %17, %18 : vector<8x1xf32>
    %cst_13 = arith.constant 9.99999974E-6 : f32
    %20 = vector.broadcast %cst_13 : f32 to vector<8x1xf32>
    %21 = arith.addf %19, %20 : vector<8x1xf32>
    %22 = math.rsqrt %21 : vector<8x1xf32>
    %23 = vector.broadcast %22 : vector<8x1xf32> to vector<8x128xf32>
    %24 = arith.mulf %14, %23 : vector<8x128xf32>
    %25 = vector.broadcast %6 : vector<1x128xf32> to vector<8x128xf32>
    %26 = arith.mulf %24, %25 : vector<8x128xf32>
    %27 = vector.broadcast %7 : vector<1x128xf32> to vector<8x128xf32>
    %28 = arith.addf %26, %27 : vector<8x128xf32>
    %c0_14 = arith.constant 0 : index
    %c0_15 = arith.constant 0 : index
    %29 = vector.load %arg6[%c0_14, %c0_15] : memref<8x256xf32, #tpu.memory_space<vmem>>, vector<8x128xf32>
    tpu.vector_store %arg6[%c0_14, %c0_15], %28 {strides = array<i32>} : memref<8x256xf32, #tpu.memory_space<vmem>>, vector<8x128xf32>,
    %30 = vector.extract_strided_slice %5 {offsets = [0, 128], sizes = [8, 128], strides = [1, 1]} : vector<8x256xf32> to vector<8x128xf32>
    %cst_16 = arith.constant dense<0.000000e+00> : vector<8xf32>
    %31 = vector.multi_reduction <add>, %30, %cst_16 [1] : vector<8x128xf32> to vector<8xf32>
    %32 = vector.shape_cast %31 : vector<8xf32> to vector<8x1xf32>
    %cst_17 = arith.constant 1.280000e+02 : f32
    %33 = vector.broadcast %cst_17 : f32 to vector<8x1xf32>
    %34 = arith.divf %32, %33 : vector<8x1xf32>
    %35 = vector.broadcast %34 : vector<8x1xf32> to vector<8x128xf32>
    %36 = arith.subf %30, %35 : vector<8x128xf32>
    %37 = arith.mulf %36, %36 : vector<8x128xf32>
    %cst_18 = arith.constant dense<0.000000e+00> : vector<8xf32>
    %38 = vector.multi_reduction <add>, %37, %cst_18 [1] : vector<8x128xf32> to vector<8xf32>
    %39 = vector.shape_cast %38 : vector<8xf32> to vector<8x1xf32>
    %cst_19 = arith.constant 1.280000e+02 : f32
    %40 = vector.broadcast %cst_19 : f32 to vector<8x1xf32>
    %41 = arith.divf %39, %40 : vector<8x1xf32>
    %cst_20 = arith.constant 9.99999974E-6 : f32
    %42 = vector.broadcast %cst_20 : f32 to vector<8x1xf32>
    %43 = arith.addf %41, %42 : vector<8x1xf32>
    %44 = math.rsqrt %43 : vector<8x1xf32>
    %45 = vector.broadcast %44 : vector<8x1xf32> to vector<8x128xf32>
    %46 = arith.mulf %36, %45 : vector<8x128xf32>
    %47 = vector.broadcast %6 : vector<1x128xf32> to vector<8x128xf32>
    %48 = arith.mulf %46, %47 : vector<8x128xf32>
    %49 = vector.broadcast %7 : vector<1x128xf32> to vector<8x128xf32>
    %50 = arith.addf %48, %49 : vector<8x128xf32>
    %c0_21 = arith.constant 0 : index
    %c128 = arith.constant 128 : index
    %51 = vector.load %arg6[%c0_21, %c128] : memref<8x256xf32, #tpu.memory_space<vmem>>, vector<8x128xf32>
    tpu.vector_store %arg6[%c0_21, %c128], %50 {strides = array<i32>} : memref<8x256xf32, #tpu.memory_space<vmem>>, vector<8x128xf32>,
    return
  }
  func.func @transform_0(%arg0: i32) -> (i32, i32) {
    %c0_i32 = arith.constant 0 : i32
    %c0_i32_0 = arith.constant 0 : i32
    %c0_i32_1 = arith.constant 0 : i32
    return %c0_i32, %c0_i32_0 : i32, i32
  }
  func.func @transform_1(%arg0: i32) -> (i32, i32) {
    %c0_i32 = arith.constant 0 : i32
    %c0_i32_0 = arith.constant 0 : i32
    return %c0_i32, %arg0 : i32, i32
  }
  func.func @transform_2(%arg0: i32) -> (i32, i32) {
    %c0_i32 = arith.constant 0 : i32
    %c0_i32_0 = arith.constant 0 : i32
    return %c0_i32, %arg0 : i32, i32
  }
  func.func @transform_3(%arg0: i32) -> (i32, i32) {
    %c0_i32 = arith.constant 0 : i32
    %c0_i32_0 = arith.constant 0 : i32
    %c0_i32_1 = arith.constant 0 : i32
    return %c0_i32, %c0_i32_0 : i32, i32
  }
  func.func @transform_4(%arg0: i32) -> (i32, i32) {
    %c0_i32 = arith.constant 0 : i32
    %c0_i32_0 = arith.constant 0 : i32
    %c0_i32_1 = arith.constant 0 : i32
    return %c0_i32, %c0_i32_0 : i32, i32
  }
  func.func @transform_5(%arg0: i32) -> (i32, i32) {
    %c0_i32 = arith.constant 0 : i32
    %c0_i32_0 = arith.constant 0 : i32
    return %c0_i32, %arg0 : i32, i32
  }
}

</mosaic_0001>

<llo_original>
// kernel: image_proj_model.1
$region0: #{image_proj_model.1}
  #allocation0 [shape = 'u32[]', space=smem, size = 0x4, offset = 0x4, fixed_abs, tag = 'smem constant byte address 0x4 - core index']
  #allocation1 [shape = 'u32[144,128]{1,0:T(1,128)}', space=vmem, size = 0x12000, scoped, tag = 'internal scratch']
  %s0 = inlined_call_operand.vmem [shape: f32[8,64], index: 0, kind: input, shape index: {}]
  %s1 = inlined_call_operand.hbm [shape: f32[64,512], index: 1, kind: input, shape index: {}]
  %s2 = inlined_call_operand.vmem [shape: f32[1,512], index: 2, kind: input, shape index: {}]
  %s3 = inlined_call_operand.vmem [shape: f32[1,128], index: 3, kind: input, shape index: {}]
  %s4 = inlined_call_operand.vmem [shape: f32[1,128], index: 4, kind: input, shape index: {}]
  %s5 = inlined_call_operand.vmem [shape: f32[8,512], index: 5, kind: output, shape index: {}]
  %s6 = sld [smem:[#allocation0]]
  $region57: #{image_proj_model.1} parent=0
    _
  %s8 = ssub.s32 1, %s6
  %s9 = scalar_select 0, %s8, %s6
  $region1: #{image_proj_model.1} parent=0
    #allocation2 [shape = 'u8[131072]{0}', space=vmem, size = 0x20000, scoped, tag = 'input window, operand 1']
    #allocation3 [shape = 's32[2]{0}', space=sflag, size = 0x8, scoped, tag = 'scoped memory for image_proj_model.1']
    %10 = vsyncpa [#allocation3], 0
    %s11 = scalar_lea.sflag [#allocation3], 1
    %12 = vsyncpa %s11, 0
    loop: start=0, step=1, limit=4
    $region2: #{image_proj_model.1} parent=1 // loop_pre_header
      _
    $region3: #{image_proj_model.1} parent=1 // loop_header
      %s14 = sphi 0, %s18
      %p15 = scmp.ge.s32.totalorder %s14, 4
      %s22 = sphi 0, %s22
      %s24 = sphi 0, %s22
      %s25 = sphi 0, %s24
      %s39 = sphi 0, %s25
      %s45 = sphi 0, %s47
      %s48 = sphi 0, %s45
      %s49 = sphi 0, %s48
      %s65 = sphi 0, %s49
      %s71 = sphi 0, %s73
      %s74 = sphi 0, %s71
      %s75 = sphi 0, %s74
      %s91 = sphi 0, %s75
      %s95 = sphi 0, %s95
      %s97 = sphi 0, %s95
      %s98 = sphi 0, %s97
      %s112 = sphi 0, %s98
      %s116 = sphi 0, %s116
      %s118 = sphi 0, %s116
      %s119 = sphi 0, %s118
      %s133 = sphi 0, %s119
      %s139 = sphi 0, %s141
      %s142 = sphi 0, %s139
      %s143 = sphi 0, %s142
      %s159 = sphi 0, %s143
    $region4: #{image_proj_model.1} parent=1 // loop_header_branch
      %17 = sbr.rel (%p15) target = $region8
    $region5: #{image_proj_model.1} parent=1 // loop_body
      %s19 = ssub.s32 %s14, 1
      %s20 = ssub.s32 %s14, 2
      %s21 = sadd.s32 %s14, 1
      %s23 = sadd.s32 %s22, 1
      %p26 = scmp.eq.s32.totalorder %s14, 1
      %p27 = scmp.ne.s32.totalorder %s22, %s24
      %p28 = scmp.eq.s32.totalorder %s14, 0
      %p29 = por %p27, %p28
      %p30 = scmp.ne.s32.totalorder %s22, %s24
      %p31 = scmp.eq.s32.totalorder %s19, 1
      %p32 = por %p30, %p31
      %p33 = scmp.ne.s32.totalorder %s24, %s25
      %p34 = scmp.eq.s32.totalorder %s19, 0
      %p35 = por %p33, %p34
      %p36 = scmp.ne.s32.totalorder %s24, %s25
      %p37 = scmp.eq.s32.totalorder %s20, 1
      %p38 = por %p36, %p37
      %p40 = scmp.ne.s32.totalorder %s25, %s39
      %p41 = scmp.eq.s32.totalorder %s20, 0
      %p42 = por %p40, %p41
      %s43 = ssub.s32 %s14, %s21
      %p44 = scmp.eq.s32.totalorder %s43, 0
      %s46 = sadd.s32 %s45, 1
      %s47 = scalar_select %p44, %s45, %s46
      %p50 = pneg %p44
      %p51 = scmp.eq.s32.totalorder %s14, 1
      %p52 = por %p50, %p51
      %p53 = scmp.ne.s32.totalorder %s45, %s48
      %p54 = scmp.eq.s32.totalorder %s14, 0
      %p55 = por %p53, %p54
      %p56 = scmp.ne.s32.totalorder %s45, %s48
      %p57 = scmp.eq.s32.totalorder %s19, 1
      %p58 = por %p56, %p57
      %p59 = scmp.ne.s32.totalorder %s48, %s49
      %p60 = scmp.eq.s32.totalorder %s19, 0
      %p61 = por %p59, %p60
      %p62 = scmp.ne.s32.totalorder %s48, %s49
      %p63 = scmp.eq.s32.totalorder %s20, 1
      %p64 = por %p62, %p63
      %p66 = scmp.ne.s32.totalorder %s49, %s65
      %p67 = scmp.eq.s32.totalorder %s20, 0
      %p68 = por %p66, %p67
      %s69 = ssub.s32 %s14, %s21
      %p70 = scmp.eq.s32.totalorder %s69, 0
      %s72 = sadd.s32 %s71, 1
      %s73 = scalar_select %p70, %s71, %s72
      %p76 = pneg %p70
      %p77 = scmp.eq.s32.totalorder %s14, 1
      %p78 = por %p76, %p77
      %p79 = scmp.ne.s32.totalorder %s71, %s74
      %p80 = scmp.eq.s32.totalorder %s14, 0
      %p81 = por %p79, %p80
      %p82 = scmp.ne.s32.totalorder %s71, %s74
      %p83 = scmp.eq.s32.totalorder %s19, 1
      %p84 = por %p82, %p83
      %p85 = scmp.ne.s32.totalorder %s74, %s75
      %p86 = scmp.eq.s32.totalorder %s19, 0
      %p87 = por %p85, %p86
      %p88 = scmp.ne.s32.totalorder %s74, %s75
      %p89 = scmp.eq.s32.totalorder %s20, 1
      %p90 = por %p88, %p89
      %p92 = scmp.ne.s32.totalorder %s75, %s91
      %p93 = scmp.eq.s32.totalorder %s20, 0
      %p94 = por %p92, %p93
      %s96 = sadd.s32 %s95, 1
      %p99 = scmp.eq.s32.totalorder %s14, 1
      %p100 = scmp.ne.s32.totalorder %s95, %s97
      %p101 = scmp.eq.s32.totalorder %s14, 0
      %p102 = por %p100, %p101
      %p103 = scmp.ne.s32.totalorder %s95, %s97
      %p104 = scmp.eq.s32.totalorder %s19, 1
      %p105 = por %p103, %p104
      %p106 = scmp.ne.s32.totalorder %s97, %s98
      %p107 = scmp.eq.s32.totalorder %s19, 0
      %p108 = por %p106, %p107
      %p109 = scmp.ne.s32.totalorder %s97, %s98
      %p110 = scmp.eq.s32.totalorder %s20, 1
      %p111 = por %p109, %p110
      %p113 = scmp.ne.s32.totalorder %s98, %s112
      %p114 = scmp.eq.s32.totalorder %s20, 0
      %p115 = por %p113, %p114
      %s117 = sadd.s32 %s116, 1
      %p120 = scmp.eq.s32.totalorder %s14, 1
      %p121 = scmp.ne.s32.totalorder %s116, %s118
      %p122 = scmp.eq.s32.totalorder %s14, 0
      %p123 = por %p121, %p122
      %p124 = scmp.ne.s32.totalorder %s116, %s118
      %p125 = scmp.eq.s32.totalorder %s19, 1
      %p126 = por %p124, %p125
      %p127 = scmp.ne.s32.totalorder %s118, %s119
      %p128 = scmp.eq.s32.totalorder %s19, 0
      %p129 = por %p127, %p128
      %p130 = scmp.ne.s32.totalorder %s118, %s119
      %p131 = scmp.eq.s32.totalorder %s20, 1
      %p132 = por %p130, %p131
      %p134 = scmp.ne.s32.totalorder %s119, %s133
      %p135 = scmp.eq.s32.totalorder %s20, 0
      %p136 = por %p134, %p135
      %s137 = ssub.s32 %s14, %s21
      %p138 = scmp.eq.s32.totalorder %s137, 0
      %s140 = sadd.s32 %s139, 1
      %s141 = scalar_select %p138, %s139, %s140
      %p144 = pneg %p138
      %p145 = scmp.eq.s32.totalorder %s14, 1
      %p146 = por %p144, %p145
      %p147 = scmp.ne.s32.totalorder %s139, %s142
      %p148 = scmp.eq.s32.totalorder %s14, 0
      %p149 = por %p147, %p148
      %p150 = scmp.ne.s32.totalorder %s139, %s142
      %p151 = scmp.eq.s32.totalorder %s19, 1
      %p152 = por %p150, %p151
      %p153 = scmp.ne.s32.totalorder %s142, %s143
      %p154 = scmp.eq.s32.totalorder %s19, 0
      %p155 = por %p153, %p154
      %p156 = scmp.ne.s32.totalorder %s142, %s143
      %p157 = scmp.eq.s32.totalorder %s20, 1
      %p158 = por %p156, %p157
      %p160 = scmp.ne.s32.totalorder %s143, %s159
      %p161 = scmp.eq.s32.totalorder %s20, 0
      %p162 = por %p160, %p161
      %p163 = scmp.le.s32.totalorder 1, %s14
      %p164 = scmp.lt.s32.totalorder %s14, 3
      %p165 = pnand %p163, %p164
      %p166 = pneg %p165
      // Predicated region
      $region9: #{image_proj_model.1} parent=5 // pred_check
        _
      $region10: #{image_proj_model.1} parent=5 // pred_check_branch
        %168 = sbr.rel (%p165) target = $region12
      $region11: #{image_proj_model.1} parent=5 // pred_region
        %s169 = ssub.s32 %s14, 1
        // Predicated region
        $region13: #{image_proj_model.1} parent=11 // pred_check
          %p170 = pneg %p35
        $region14: #{image_proj_model.1} parent=11 // pred_check_branch
          %172 = sbr.rel (%p170) target = $region16
        $region15: #{image_proj_model.1} parent=11 // pred_region
          _
        $region16: #{image_proj_model.1} parent=11 // pred_fallthru
          _
        // Predicated region
        $region17: #{image_proj_model.1} parent=11 // pred_check
          %p173 = pneg %p108
        $region18: #{image_proj_model.1} parent=11 // pred_check_branch
          %175 = sbr.rel (%p173) target = $region20
        $region19: #{image_proj_model.1} parent=11 // pred_region
          _
        $region20: #{image_proj_model.1} parent=11 // pred_fallthru
          _
        // Predicated region
        $region21: #{image_proj_model.1} parent=11 // pred_check
          %p176 = pneg %p129
        $region22: #{image_proj_model.1} parent=11 // pred_check_branch
          %178 = sbr.rel (%p176) target = $region24
        $region23: #{image_proj_model.1} parent=11 // pred_region
          _
        $region24: #{image_proj_model.1} parent=11 // pred_fallthru
          _
      $region12: #{image_proj_model.1} parent=5 // pred_fallthru
        _
      %p179 = scmp.lt.s32.totalorder %s14, 2
      // Predicated region
      $region25: #{image_proj_model.1} parent=5 // pred_check
        %p180 = pneg %p179
      $region26: #{image_proj_model.1} parent=5 // pred_check_branch
        %182 = sbr.rel (%p180) target = $region28
      $region27: #{image_proj_model.1} parent=5 // pred_region
        // Predicated region
        $region29: #{image_proj_model.1} parent=27 // pred_check
          %p183 = pneg %p55
        $region30: #{image_proj_model.1} parent=27 // pred_check_branch
          %185 = sbr.rel (%p183) target = $region32
        $region31: #{image_proj_model.1} parent=27 // pred_region
          %s186 = sand.u32 %s45, 1
          %s187 = scalar_lea.sflag [#allocation3], %s186
          %s188 = sand.u32 %s45, 1
          %s189 = smul.addr %s188, 128
          %s190 = scalar_lea.vmem [#allocation2], %s189
          %s191 = smul.u32 2, %s14
          %s193 = ssub.s32 2048, 2048
          %194 = vsyncadd %s187, %s193
          %s195 = smul.addr %s191, 128
          %s196 = scalar_lea.hbm %s1, %s195
          %s197 = sshll.u32 %s190, 4
          %s198 = int_to_ptr.vmem [resolvable:$true] %s197
          %203 = dma.hbm_to_vmem [thread:$0]  %s196, 2048, %s198, %s187, 512, 256, 16
        $region32: #{image_proj_model.1} parent=27 // pred_fallthru
          _
        // Predicated region
        $region33: #{image_proj_model.1} parent=27 // pred_check
          %p204 = pneg %p81
        $region34: #{image_proj_model.1} parent=27 // pred_check_branch
          %206 = sbr.rel (%p204) target = $region36
        $region35: #{image_proj_model.1} parent=27 // pred_region
          %s207 = smul.u32 2, %s14
          %p208 = scmp.lt.s32.totalorder %s207, 3
          %s209 = scalar_select %p208, %s207, 3
          %s210 = scalar_lea.vmem %s2, %s209
          %s211 = smul.u32 2, %s14
        $region36: #{image_proj_model.1} parent=27 // pred_fallthru
          _
      $region28: #{image_proj_model.1} parent=5 // pred_fallthru
        _
      %p212 = scmp.le.s32.totalorder 1, %s14
      %p213 = scmp.lt.s32.totalorder %s14, 3
      %p214 = pnand %p212, %p213
      %p215 = pneg %p214
      // Predicated region
      $region37: #{image_proj_model.1} parent=5 // pred_check
        _
      $region38: #{image_proj_model.1} parent=5 // pred_check_branch
        %217 = sbr.rel (%p214) target = $region40
      $region39: #{image_proj_model.1} parent=5 // pred_region
        %s218 = ssub.s32 %s14, 1
        %s219 = sand.u32 %s48, 1
        %s220 = scalar_lea.sflag [#allocation3], %s219
        %s221 = sand.u32 %s48, 1
        %s222 = smul.addr %s221, 128
        %s223 = scalar_lea.vmem [#allocation2], %s222
        // Predicated region
        $region41: #{image_proj_model.1} parent=39 // pred_check
          %p224 = pneg %p61
        $region42: #{image_proj_model.1} parent=39 // pred_check_branch
          %226 = sbr.rel (%p224) target = $region44
        $region43: #{image_proj_model.1} parent=39 // pred_region
          %227 = dma.done %s220, 2048
        $region44: #{image_proj_model.1} parent=39 // pred_fallthru
          _
        %p228 = pneg %p35
        %p229 = pneg %p32
        %s230 = sand.u32 %s48, 1
        %s231 = scalar_lea.sflag [#allocation3], %s230
        %s232 = sand.u32 %s48, 1
        %s233 = smul.addr %s232, 128
        %s234 = scalar_lea.vmem [#allocation2], %s233
        %p235 = pneg %p61
        %p236 = pneg %p58
        %s237 = smul.u32 2, %s19
        %p238 = scmp.lt.s32.totalorder %s237, 3
        %s239 = scalar_select %p238, %s237, 3
        %s240 = scalar_lea.vmem %s2, %s239
        %p241 = pneg %p87
        %p242 = pneg %p84
        %p243 = pneg %p108
        %p244 = pneg %p105
        %p245 = pneg %p129
        %p246 = pneg %p126
        %p247 = pneg %p155
        %p248 = pneg %p152
        %s249 = smul.u32 2, %s19
        %p250 = scmp.lt.s32.totalorder %s249, 3
        %s251 = scalar_select %p250, %s249, 3
        %s252 = smul.addr %s251, 8
        %s253 = scalar_lea.vmem %s5, %s252
        %s254 = smul.u32 2, %s19
        %s255 = smul.u32 2, %s19
        %p256 = scmp.lt.s32.totalorder %s255, 3
        %s257 = scalar_select %p256, %s255, 3
        %s258 = scalar_lea.vmem %s2, %s257
        %s259 = smul.u32 2, %s19
        %s260 = smul.u32 2, %s19
        %p261 = scmp.lt.s32.totalorder %s260, 3
        %s262 = scalar_select %p261, %s260, 3
        %s263 = smul.addr %s262, 8
        %s264 = scalar_lea.vmem %s5, %s263
        %s265 = smul.u32 2, %s19
        %v266 = vld [vmem:[%s0] sm:$0xff]
        %v267 = vld [vmem:[%s223] sm:$0xff]
        %v268 = vld [vmem:[%s223 + $0x8] sm:$0xff]
        %v269 = vld [vmem:[%s223 + $0x10] sm:$0xff]
        %v270 = vld [vmem:[%s223 + $0x18] sm:$0xff]
        %v271 = vld [vmem:[%s223 + $0x20] sm:$0xff]
        %v272 = vld [vmem:[%s223 + $0x28] sm:$0xff]
        %v273 = vld [vmem:[%s223 + $0x30] sm:$0xff]
        %v274 = vld [vmem:[%s223 + $0x38] sm:$0xff]
        %v275 = vld [vmem:[%s223 + $0x40] sm:$0xff]
        %v276 = vld [vmem:[%s223 + $0x48] sm:$0xff]
        %v277 = vld [vmem:[%s223 + $0x50] sm:$0xff]
        %v278 = vld [vmem:[%s223 + $0x58] sm:$0xff]
        %v279 = vld [vmem:[%s223 + $0x60] sm:$0xff]
        %v280 = vld [vmem:[%s223 + $0x68] sm:$0xff]
        %v281 = vld [vmem:[%s223 + $0x70] sm:$0xff]
        %v282 = vld [vmem:[%s223 + $0x78] sm:$0xff]
        %v283 = vld [vmem:[%s258] sm:$0x3]
        %v285 = vlaneseq
        %v286 = vshrl.u32 %v285, 7
        %v287 = vsub.s32 0, %v286
        %v288 = vrot.slane %v283, %v287
        %v289 = vlaneseq
        %v290 = vshrl.u32 %v289, 7
        %v291 = vsub.s32 1, %v290
        %v292 = vrot.slane %v283, %v291
        %vm295 = vcmask 523264
        %v297 = vsel %vm295, %v266, 0
        %299 = vmatprep.subr.mxu0 %v268
        %300 = vmatpush1.msra.mxu0 %v267
        %301 = vmatprep.subr.mxu0 %v270
        %302 = vmatpush1.msra.mxu0 %v269
        %303 = vmatprep.subr.mxu0 %v272
        %304 = vmatpush1.msra.mxu0 %v271
        %305 = vmatprep.subr.mxu0 %v274
        %306 = vmatpush1.msra.mxu0 %v273
        %307 = vmatprep.subr.mxu0 %v276
        %308 = vmatpush1.msra.mxu0 %v275
        %309 = vmatprep.subr.mxu0 %v278
        %310 = vmatpush1.msra.mxu0 %v277
        %311 = vmatprep.subr.mxu0 %v280
        %312 = vmatpush1.msra.mxu0 %v279
        %313 = vmatprep.subr.mxu0 %v282
        %314 = vmatpush1.msra.mxu0 %v281
        %315 = vmatprep.subr.mxu0 0.0
        %316 = vmatpush1.msra.mxu0 0.0
        %317 = vmatprep.subr.mxu0 0.0
        %318 = vmatpush1.msra.mxu0 0.0
        %319 = vmatprep.subr.mxu0 0.0
        %320 = vmatpush1.msra.mxu0 0.0
        %321 = vmatprep.subr.mxu0 0.0
        %322 = vmatpush1.msra.mxu0 0.0
        %323 = vmatprep.subr.mxu0 0.0
        %324 = vmatpush1.msra.mxu0 0.0
        %325 = vmatprep.subr.mxu0 0.0
        %326 = vmatpush1.msra.mxu0 0.0
        %327 = vmatprep.subr.mxu0 0.0
        %328 = vmatpush1.msra.mxu0 0.0
        %329 = vmatprep.subr.mxu0 0.0
        %330 = vmatpush1.msra.mxu0 0.0
        %331 = vmatprep.subr.mxu0 0.0
        %332 = vmatpush1.msra.mxu0 0.0
        %333 = vmatprep.subr.mxu0 0.0
        %334 = vmatpush1.msra.mxu0 0.0
        %335 = vmatprep.subr.mxu0 0.0
        %336 = vmatpush1.msra.mxu0 0.0
        %337 = vmatprep.subr.mxu0 0.0
        %338 = vmatpush1.msra.mxu0 0.0
        %339 = vmatprep.subr.mxu0 0.0
        %340 = vmatpush1.msra.mxu0 0.0
        %341 = vmatprep.subr.mxu0 0.0
        %342 = vmatpush1.msra.mxu0 0.0
        %343 = vmatprep.subr.mxu0 0.0
        %344 = vmatpush1.msra.mxu0 0.0
        %345 = vmatprep.subr.mxu0 0.0
        %346 = vmatpush1.msra.mxu0 0.0
        %347 = vmatprep.subr.mxu0 0.0
        %348 = vmatpush1.msra.mxu0 0.0
        %349 = vmatprep.subr.mxu0 0.0
        %350 = vmatpush1.msra.mxu0 0.0
        %351 = vmatprep.subr.mxu0 0.0
        %352 = vmatpush1.msra.mxu0 0.0
        %353 = vmatprep.subr.mxu0 0.0
        %354 = vmatpush1.msra.mxu0 0.0
        %355 = vmatprep.subr.mxu0 0.0
        %356 = vmatpush1.msra.mxu0 0.0
        %357 = vmatprep.subr.mxu0 0.0
        %358 = vmatpush1.msra.mxu0 0.0
        %359 = vmatprep.subr.mxu0 0.0
        %360 = vmatpush1.msra.mxu0 0.0
        %361 = vmatprep.subr.mxu0 0.0
        %362 = vmatpush1.msra.mxu0 0.0
        %363 = vmatprep.mubr.f32.mxu0 0.0
        %364 = vmatmul.mubr.f32.gmra.mrb[0].mxu0 %v297
        %v365 = vpop.f32.mrb[0].mxu0
        %v366 = vadd.f32 %v288, %v365
        %v367 = vpop.f32.mrb[0].mxu0
        %v368 = vadd.f32 %v292, %v367
        %369 = vdwg.mxu0
        %v370 = vld [vmem:[%s3] sm:$0x1]
        %v371 = vld [vmem:[%s4] sm:$0x1]
        %372 = vadd.xlane.f32.xlu0 %v366
        %v373 = vpop.xlane.xlu0 %372
        %v374 = vrcp.pop 128.0
        %v375 = vmul.f32 %v373, %v374
        %v376 = vsub.f32 %v366, %v375
        %v377 = vmul.f32 %v376, %v376
        %378 = vadd.xlane.f32.xlu0 %v377
        %v379 = vpop.xlane.xlu0 %378
        %v380 = vmul.f32 %v379, %v374
        %v381 = vadd.f32 %v380, 1e-05
        %v382 = vrsqrt.pop %v381
        %v383 = vmul.f32 %v376, %v382
        %v385 = vlaneseq
        %v386 = vshrl.u32 %v385, 7
        %v387 = vsub.s32 0, %v386
        %v388 = vrot.slane %v370, %v387
        %v390 = vmul.f32 %v383, %v388
        %v392 = vlaneseq
        %v393 = vshrl.u32 %v392, 7
        %v394 = vsub.s32 0, %v393
        %v395 = vrot.slane %v371, %v394
        %v397 = vadd.f32 %v390, %v395
        %398 = vst [vmem:[%s264] sm:$0xff] %v397
        %399 = vadd.xlane.f32.xlu0 %v368
        %v400 = vpop.xlane.xlu0 %399
        %v401 = vmul.f32 %v400, %v374
        %v402 = vsub.f32 %v368, %v401
        %v403 = vmul.f32 %v402, %v402
        %404 = vadd.xlane.f32.xlu0 %v403
        %v405 = vpop.xlane.xlu0 %404
        %v406 = vmul.f32 %v405, %v374
        %v407 = vadd.f32 %v406, 1e-05
        %v408 = vrsqrt.pop %v407
        %v409 = vmul.f32 %v402, %v408
        %v410 = vmul.f32 %v409, %v388
        %v411 = vadd.f32 %v410, %v395
        %412 = vst [vmem:[%s264 + $0x8] sm:$0xff] %v411
        %s413 = smul.u32 2, %s19
        %p414 = scmp.lt.s32.totalorder %s413, 3
        %s415 = scalar_select %p414, %s413, 3
        %s416 = smul.addr %s415, 8
        %s417 = scalar_lea.vmem %s5, %s416
        // Predicated region
        $region45: #{image_proj_model.1} parent=39 // pred_check
          %p418 = pneg %p152
        $region46: #{image_proj_model.1} parent=39 // pred_check_branch
          %420 = sbr.rel (%p418) target = $region48
        $region47: #{image_proj_model.1} parent=39 // pred_region
          %s421 = smul.u32 2, %s19
        $region48: #{image_proj_model.1} parent=39 // pred_fallthru
          _
      $region40: #{image_proj_model.1} parent=5 // pred_fallthru
        _
      %p422 = scmp.le.s32.totalorder 2, %s14
      // Predicated region
      $region49: #{image_proj_model.1} parent=5 // pred_check
        %p423 = pneg %p422
      $region50: #{image_proj_model.1} parent=5 // pred_check_branch
        %425 = sbr.rel (%p423) target = $region52
      $region51: #{image_proj_model.1} parent=5 // pred_region
        %s426 = ssub.s32 %s14, 2
        // Predicated region
        $region53: #{image_proj_model.1} parent=51 // pred_check
          %p427 = pneg %p158
        $region54: #{image_proj_model.1} parent=51 // pred_check_branch
          %429 = sbr.rel (%p427) target = $region56
        $region55: #{image_proj_model.1} parent=51 // pred_region
          %s430 = smul.u32 2, %s20
          %p431 = scmp.lt.s32.totalorder %s430, 3
          %s432 = scalar_select %p431, %s430, 3
          %s433 = smul.addr %s432, 8
          %s434 = scalar_lea.vmem %s5, %s433
        $region56: #{image_proj_model.1} parent=51 // pred_fallthru
          _
      $region52: #{image_proj_model.1} parent=5 // pred_fallthru
        _
    $region6: #{image_proj_model.1} parent=1 // loop_footer
      %s18 = sadd.s32 1, %s14
    $region7: #{image_proj_model.1} parent=1 // loop_footer_branch
      %13 = sbr.rel target = $region3
    $region8: #{image_proj_model.1} parent=1 // loop_exit
      _
    %435 = vsyncpa [#allocation3], 1
    %s436 = scalar_lea.sflag [#allocation3], 1
    %437 = vsyncpa %s436, 1

</llo_original>
